<compile_context>
chip_gen: v7x
topology: tpu7x:2x2x1
jax: 0.10.0
libtpu: 0.0.40
codegen_flags: <defaults>
</compile_context>

<pallas_src>
import jax
import jax.numpy as jnp
from jax.experimental import pallas as pl
from jax.experimental.pallas import tpu as pltpu


def _round_up(n, m):
    return ((n + m - 1) // m) * m


def paper_nn_kernel(xT_ref, w1t_ref, b1_ref, w2t_ref, b2_ref, oT_ref):
    # Feature-major: batch tile lives on the lane axis of every tensor.
    #   h^T = relu(W1^T @ x^T + b1)   -> (dh,   TILE_N)
    #   y^T = W2^T @ h^T + b2         -> (dout, TILE_N)
    h = jnp.dot(w1t_ref[...], xT_ref[...], preferred_element_type=jnp.float32)
    h = jnp.maximum(h + b1_ref[...], 0.0)
    y = jnp.dot(w2t_ref[...], h, preferred_element_type=jnp.float32)
    oT_ref[...] = (y + b2_ref[...]).astype(oT_ref.dtype)


def paper_nn_forward(x, w1, b1, w2, b2, *, tile_n=4096, min_pallas_rows=1024):
    """relu(x @ W1 + b1) @ W2 + b2.

    x:  (N, dim_input)            (batch-major, like PyTorch "N x state_dims")
    w1: (dim_input, dim_hidden)   b1: (dim_hidden,)
    w2: (dim_hidden, dim_output)  b2: (dim_output,)
    Returns (N, dim_output).
    """
    N, din = x.shape
    dh = w1.shape[1]
    dout = w2.shape[1]

    # Tiny batches: pallas_call launch + DMA setup dominates ~KFLOPs of work;
    # the fused XLA expression is strictly faster there.
    if N < min_pallas_rows:
        return (jnp.maximum(x @ w1 + b1, 0.0) @ w2 + b2).astype(x.dtype)

    # Lane-dense feature-major layout; tile the batch along the lane axis.
    tile_n = _round_up(tile_n, 128)
    tile = min(tile_n, _round_up(N, 128))       # multiple of 128
    n_pad = _round_up(N, tile)

    xT = x.T                                    # (din, N)
    if n_pad != N:
        xT = jnp.pad(xT, ((0, 0), (0, n_pad - N)))
    w1t = w1.T                                  # (dh, din)
    w2t = w2.T                                  # (dout, dh)
    b1c = b1.reshape(dh, 1)
    b2c = b2.reshape(dout, 1)

    outT = pl.pallas_call(
        paper_nn_kernel,
        out_shape=jax.ShapeDtypeStruct((dout, n_pad), x.dtype),
        grid_spec=pltpu.PrefetchScalarGridSpec(
            num_scalar_prefetch=0,
            grid=(n_pad // tile,),
            in_specs=[
                # streamed per grid step (lane-dense, double-buffered)
                pl.BlockSpec((din, tile), lambda i: (0, i)),
                # weights / biases: constant block index -> VMEM-resident
                pl.BlockSpec((dh, din), lambda i: (0, 0)),
                pl.BlockSpec((dh, 1), lambda i: (0, 0)),
                pl.BlockSpec((dout, dh), lambda i: (0, 0)),
                pl.BlockSpec((dout, 1), lambda i: (0, 0)),
            ],
            out_specs=pl.BlockSpec((dout, tile), lambda i: (0, i)),
        ),
        compiler_params=pltpu.CompilerParams(
            # Independent batch tiles: shard across both TensorCores on v7x
            # (harmless on single-TC v5e/v6e).
            dimension_semantics=("parallel",),
        ),
    )(xT, w1t, b1c, w2t, b2c)

    return outT[:, :N].T


def init_params(key, dim_input=3, dim_hidden=100, dim_output=3):
    """Mimics torch.nn.Linear default init: U(-1/sqrt(fan_in), 1/sqrt(fan_in)).
    Weights stored as (in, out), i.e. transposed vs torch.nn.Linear.weight."""
    k1, k2, k3, k4 = jax.random.split(key, 4)
    bound1 = 1.0 / jnp.sqrt(dim_input)
    bound2 = 1.0 / jnp.sqrt(dim_hidden)
    w1 = jax.random.uniform(k1, (dim_input, dim_hidden), jnp.float32, -bound1, bound1)
    b1 = jax.random.uniform(k2, (dim_hidden,), jnp.float32, -bound1, bound1)
    w2 = jax.random.uniform(k3, (dim_hidden, dim_output), jnp.float32, -bound2, bound2)
    b2 = jax.random.uniform(k4, (dim_output,), jnp.float32, -bound2, bound2)
    return w1, b1, w2, b2


if __name__ == "__main__":
    key = jax.random.PRNGKey(0)
    k_x1, k_x2, k_p = jax.random.split(key, 3)

    dim_x, dim_y, dim_output, dim_hidden = 1, 2, 3, 100
    dim_input = dim_x + dim_y
    w1, b1, w2, b2 = init_params(k_p, dim_input, dim_hidden, dim_output)

    # Batch large enough to take the Pallas path; non-multiple of the tile to
    # exercise the padding path; tile_n=512 gives a multi-step (grid=(4,)) run.
    N_big = 2000
    x_big = jax.random.normal(k_x1, (N_big, dim_input), dtype=jnp.float32)
    out_big = paper_nn_forward(x_big, w1, b1, w2, b2,
                               tile_n=512, min_pallas_rows=512)
    out_big = jax.block_until_ready(out_big)
    ref_big = jnp.maximum(x_big @ w1 + b1, 0.0) @ w2 + b2
    assert out_big.shape == (N_big, dim_output)
    assert jnp.allclose(out_big, ref_big, atol=1e-4, rtol=1e-4)

    # Tiny batch (the original N=8 demo): dispatched to the fused XLA fast path.
    N_small = 8
    x_small = jax.random.normal(k_x2, (N_small, dim_input), dtype=jnp.float32)
    out_small = jax.block_until_ready(paper_nn_forward(x_small, w1, b1, w2, b2))
    ref_small = jnp.maximum(x_small @ w1 + b1, 0.0) @ w2 + b2
    assert out_small.shape == (N_small, dim_output)
    assert jnp.allclose(out_small, ref_small, atol=1e-4, rtol=1e-4)

    print("KERNEL_OK")
</pallas_src>

<mosaic_0001>
module attributes {stable_mosaic.version = 11 : i64} {
  func.func @paper_nn_kernel(%arg0: i32, %arg1: memref<3x512xf32, #tpu.memory_space<vmem>>, %arg2: memref<100x3xf32, #tpu.memory_space<vmem>>, %arg3: memref<100x1xf32, #tpu.memory_space<vmem>>, %arg4: memref<3x100xf32, #tpu.memory_space<vmem>>, %arg5: memref<3x1xf32, #tpu.memory_space<vmem>>, %arg6: memref<3x512xf32, #tpu.memory_space<vmem>>) attributes {dimension_semantics = [#tpu.dimension_semantics<parallel>], iteration_bounds = array<i64: 4>, scalar_prefetch = 0 : i64, scratch_operands = 0 : i64, tpu.core_type = #tpu.core_type<tc>, window_params = [{transform_indices = @transform_0, window_bounds = array<i64: 3, 512>}, {pipeline_mode = #tpu.pipeline_mode<synchronous>, transform_indices = @transform_1, window_bounds = array<i64: 100, 3>}, {pipeline_mode = #tpu.pipeline_mode<synchronous>, transform_indices = @transform_2, window_bounds = array<i64: 100, 1>}, {pipeline_mode = #tpu.pipeline_mode<synchronous>, transform_indices = @transform_3, window_bounds = array<i64: 3, 100>}, {pipeline_mode = #tpu.pipeline_mode<synchronous>, transform_indices = @transform_4, window_bounds = array<i64: 3, 1>}, {transform_indices = @transform_5, window_bounds = array<i64: 3, 512>}]} {
    %c0 = arith.constant 0 : index
    %c0_0 = arith.constant 0 : index
    %0 = vector.load %arg2[%c0, %c0_0] : memref<100x3xf32, #tpu.memory_space<vmem>>, vector<100x3xf32>
    %c0_1 = arith.constant 0 : index
    %c0_2 = arith.constant 0 : index
    %1 = vector.load %arg1[%c0_1, %c0_2] : memref<3x512xf32, #tpu.memory_space<vmem>>, vector<3x512xf32>
    %cst = arith.constant dense<0.000000e+00> : vector<100x512xf32>
    %2 = tpu.matmul %0, %1, %cst {dimension_numbers = #tpu.dot_dimension_numbers<[1], [0], [0], [1], [0, 0, 1, 1], [], []>} : vector<100x3xf32>, vector<3x512xf32>, vector<100x512xf32> -> vector<100x512xf32>
    %c0_3 = arith.constant 0 : index
    %c0_4 = arith.constant 0 : index
    %3 = vector.load %arg3[%c0_3, %c0_4] : memref<100x1xf32, #tpu.memory_space<vmem>>, vector<100x1xf32>
    %4 = vector.broadcast %3 : vector<100x1xf32> to vector<100x512xf32>
    %5 = arith.addf %2, %4 : vector<100x512xf32>
    %cst_5 = arith.constant 0.000000e+00 : f32
    %6 = vector.broadcast %cst_5 : f32 to vector<100x512xf32>
    %7 = arith.maximumf %5, %6 : vector<100x512xf32>
    %c0_6 = arith.constant 0 : index
    %c0_7 = arith.constant 0 : index
    %8 = vector.load %arg4[%c0_6, %c0_7] : memref<3x100xf32, #tpu.memory_space<vmem>>, vector<3x100xf32>
    %cst_8 = arith.constant dense<0.000000e+00> : vector<3x512xf32>
    %9 = tpu.matmul %8, %7, %cst_8 {dimension_numbers = #tpu.dot_dimension_numbers<[1], [0], [0], [1], [0, 0, 1, 1], [], []>} : vector<3x100xf32>, vector<100x512xf32>, vector<3x512xf32> -> vector<3x512xf32>
    %c0_9 = arith.constant 0 : index
    %c0_10 = arith.constant 0 : index
    %10 = vector.load %arg5[%c0_9, %c0_10] : memref<3x1xf32, #tpu.memory_space<vmem>>, vector<3x1xf32>
    %11 = vector.broadcast %10 : vector<3x1xf32> to vector<3x512xf32>
    %12 = arith.addf %9, %11 : vector<3x512xf32>
    %c0_11 = arith.constant 0 : index
    %c0_12 = arith.constant 0 : index
    %13 = vector.load %arg6[%c0_11, %c0_12] : memref<3x512xf32, #tpu.memory_space<vmem>>, vector<3x512xf32>
    tpu.vector_store %arg6[%c0_11, %c0_12], %12 {strides = array<i32>} : memref<3x512xf32, #tpu.memory_space<vmem>>, vector<3x512xf32>,
    return
  }
  func.func @transform_0(%arg0: i32) -> (i32, i32) {
    %c0_i32 = arith.constant 0 : i32
    %c0_i32_0 = arith.constant 0 : i32
    return %c0_i32, %arg0 : i32, i32
  }
  func.func @transform_1(%arg0: i32) -> (i32, i32) {
    %c0_i32 = arith.constant 0 : i32
    %c0_i32_0 = arith.constant 0 : i32
    %c0_i32_1 = arith.constant 0 : i32
    return %c0_i32, %c0_i32_0 : i32, i32
  }
  func.func @transform_2(%arg0: i32) -> (i32, i32) {
    %c0_i32 = arith.constant 0 : i32
    %c0_i32_0 = arith.constant 0 : i32
    %c0_i32_1 = arith.constant 0 : i32
    return %c0_i32, %c0_i32_0 : i32, i32
  }
  func.func @transform_3(%arg0: i32) -> (i32, i32) {
    %c0_i32 = arith.constant 0 : i32
    %c0_i32_0 = arith.constant 0 : i32
    %c0_i32_1 = arith.constant 0 : i32
    return %c0_i32, %c0_i32_0 : i32, i32
  }
  func.func @transform_4(%arg0: i32) -> (i32, i32) {
    %c0_i32 = arith.constant 0 : i32
    %c0_i32_0 = arith.constant 0 : i32
    %c0_i32_1 = arith.constant 0 : i32
    return %c0_i32, %c0_i32_0 : i32, i32
  }
  func.func @transform_5(%arg0: i32) -> (i32, i32) {
    %c0_i32 = arith.constant 0 : i32
    %c0_i32_0 = arith.constant 0 : i32
    return %c0_i32, %arg0 : i32, i32
  }
}

</mosaic_0001>

<llo_original>
// kernel: tpu_custom_call.1
$region0: #{tpu_custom_call.1}
  #allocation0 [shape = 'u32[]', space=smem, size = 0x4, offset = 0x4, fixed_abs, tag = 'smem constant byte address 0x4 - core index']
  #allocation1 [shape = 'u32[144,128]{1,0:T(1,128)}', space=vmem, size = 0x12000, scoped, tag = 'internal scratch']
  %s0 = inlined_call_operand.vmem [shape: f32[3,2048], index: 0, kind: input, shape index: {}]
  %s1 = inlined_call_operand.vmem [shape: f32[100,3], index: 1, kind: input, shape index: {}]
  %s2 = inlined_call_operand.vmem [shape: f32[100,1], index: 2, kind: input, shape index: {}]
  %s3 = inlined_call_operand.vmem [shape: f32[3,100], index: 3, kind: input, shape index: {}]
  %s4 = inlined_call_operand.vmem [shape: f32[3,1], index: 4, kind: input, shape index: {}]
  %s5 = inlined_call_operand.hbm [shape: f32[3,2048], index: 5, kind: output, shape index: {}]
  %s6 = sld [smem:[#allocation0]]
  $region53: #{tpu_custom_call.1} parent=0
    _
  %s8 = ssub.s32 1, %s6
  %s9 = scalar_select 0, %s8, %s6
  $region1: #{tpu_custom_call.1} parent=0
    #allocation2 [shape = 'u8[16384]{0}', space=vmem, size = 0x4000, scoped, tag = 'output window, operand 0']
    #allocation3 [shape = 's32[2]{0}', space=sflag, size = 0x8, scoped, tag = 'scoped memory for tpu_custom_call.1']
    %10 = vsyncpa [#allocation3], 0
    %s11 = scalar_lea.sflag [#allocation3], 1
    %12 = vsyncpa %s11, 0
    loop: start=0, step=1, limit=6
    $region2: #{tpu_custom_call.1} parent=1 // loop_pre_header
      _
    $region3: #{tpu_custom_call.1} parent=1 // loop_header
      %s14 = sphi 0, %s18
      %p15 = scmp.ge.s32.totalorder %s14, 6
      %s24 = sphi 0, %s26
      %s27 = sphi 0, %s24
      %s28 = sphi 0, %s27
      %s44 = sphi 0, %s28
      %s48 = sphi 0, %s48
      %s50 = sphi 0, %s48
      %s51 = sphi 0, %s50
      %s65 = sphi 0, %s51
      %s69 = sphi 0, %s69
      %s71 = sphi 0, %s69
      %s72 = sphi 0, %s71
      %s86 = sphi 0, %s72
      %s90 = sphi 0, %s90
      %s92 = sphi 0, %s90
      %s93 = sphi 0, %s92
      %s107 = sphi 0, %s93
      %s111 = sphi 0, %s111
      %s113 = sphi 0, %s111
      %s114 = sphi 0, %s113
      %s128 = sphi 0, %s114
      %s134 = sphi 0, %s136
      %s137 = sphi 0, %s134
      %s138 = sphi 0, %s137
      %s154 = sphi 0, %s138
    $region4: #{tpu_custom_call.1} parent=1 // loop_header_branch
      %17 = sbr.rel (%p15) target = $region8
    $region5: #{tpu_custom_call.1} parent=1 // loop_body
      %s19 = ssub.s32 %s14, 1
      %s20 = ssub.s32 %s14, 2
      %s21 = sadd.s32 %s14, 1
      %s22 = ssub.s32 %s14, %s21
      %p23 = scmp.eq.s32.totalorder %s22, 0
      %s25 = sadd.s32 %s24, 1
      %s26 = scalar_select %p23, %s24, %s25
      %p29 = pneg %p23
      %p30 = scmp.eq.s32.totalorder %s14, 3
      %p31 = por %p29, %p30
      %p32 = scmp.ne.s32.totalorder %s24, %s27
      %p33 = scmp.eq.s32.totalorder %s14, 0
      %p34 = por %p32, %p33
      %p35 = scmp.ne.s32.totalorder %s24, %s27
      %p36 = scmp.eq.s32.totalorder %s19, 3
      %p37 = por %p35, %p36
      %p38 = scmp.ne.s32.totalorder %s27, %s28
      %p39 = scmp.eq.s32.totalorder %s19, 0
      %p40 = por %p38, %p39
      %p41 = scmp.ne.s32.totalorder %s27, %s28
      %p42 = scmp.eq.s32.totalorder %s20, 3
      %p43 = por %p41, %p42
      %p45 = scmp.ne.s32.totalorder %s28, %s44
      %p46 = scmp.eq.s32.totalorder %s20, 0
      %p47 = por %p45, %p46
      %s49 = sadd.s32 %s48, 1
      %p52 = scmp.eq.s32.totalorder %s14, 3
      %p53 = scmp.ne.s32.totalorder %s48, %s50
      %p54 = scmp.eq.s32.totalorder %s14, 0
      %p55 = por %p53, %p54
      %p56 = scmp.ne.s32.totalorder %s48, %s50
      %p57 = scmp.eq.s32.totalorder %s19, 3
      %p58 = por %p56, %p57
      %p59 = scmp.ne.s32.totalorder %s50, %s51
      %p60 = scmp.eq.s32.totalorder %s19, 0
      %p61 = por %p59, %p60
      %p62 = scmp.ne.s32.totalorder %s50, %s51
      %p63 = scmp.eq.s32.totalorder %s20, 3
      %p64 = por %p62, %p63
      %p66 = scmp.ne.s32.totalorder %s51, %s65
      %p67 = scmp.eq.s32.totalorder %s20, 0
      %p68 = por %p66, %p67
      %s70 = sadd.s32 %s69, 1
      %p73 = scmp.eq.s32.totalorder %s14, 3
      %p74 = scmp.ne.s32.totalorder %s69, %s71
      %p75 = scmp.eq.s32.totalorder %s14, 0
      %p76 = por %p74, %p75
      %p77 = scmp.ne.s32.totalorder %s69, %s71
      %p78 = scmp.eq.s32.totalorder %s19, 3
      %p79 = por %p77, %p78
      %p80 = scmp.ne.s32.totalorder %s71, %s72
      %p81 = scmp.eq.s32.totalorder %s19, 0
      %p82 = por %p80, %p81
      %p83 = scmp.ne.s32.totalorder %s71, %s72
      %p84 = scmp.eq.s32.totalorder %s20, 3
      %p85 = por %p83, %p84
      %p87 = scmp.ne.s32.totalorder %s72, %s86
      %p88 = scmp.eq.s32.totalorder %s20, 0
      %p89 = por %p87, %p88
      %s91 = sadd.s32 %s90, 1
      %p94 = scmp.eq.s32.totalorder %s14, 3
      %p95 = scmp.ne.s32.totalorder %s90, %s92
      %p96 = scmp.eq.s32.totalorder %s14, 0
      %p97 = por %p95, %p96
      %p98 = scmp.ne.s32.totalorder %s90, %s92
      %p99 = scmp.eq.s32.totalorder %s19, 3
      %p100 = por %p98, %p99
      %p101 = scmp.ne.s32.totalorder %s92, %s93
      %p102 = scmp.eq.s32.totalorder %s19, 0
      %p103 = por %p101, %p102
      %p104 = scmp.ne.s32.totalorder %s92, %s93
      %p105 = scmp.eq.s32.totalorder %s20, 3
      %p106 = por %p104, %p105
      %p108 = scmp.ne.s32.totalorder %s93, %s107
      %p109 = scmp.eq.s32.totalorder %s20, 0
      %p110 = por %p108, %p109
      %s112 = sadd.s32 %s111, 1
      %p115 = scmp.eq.s32.totalorder %s14, 3
      %p116 = scmp.ne.s32.totalorder %s111, %s113
      %p117 = scmp.eq.s32.totalorder %s14, 0
      %p118 = por %p116, %p117
      %p119 = scmp.ne.s32.totalorder %s111, %s113
      %p120 = scmp.eq.s32.totalorder %s19, 3
      %p121 = por %p119, %p120
      %p122 = scmp.ne.s32.totalorder %s113, %s114
      %p123 = scmp.eq.s32.totalorder %s19, 0
      %p124 = por %p122, %p123
      %p125 = scmp.ne.s32.totalorder %s113, %s114
      %p126 = scmp.eq.s32.totalorder %s20, 3
      %p127 = por %p125, %p126
      %p129 = scmp.ne.s32.totalorder %s114, %s128
      %p130 = scmp.eq.s32.totalorder %s20, 0
      %p131 = por %p129, %p130
      %s132 = ssub.s32 %s14, %s21
      %p133 = scmp.eq.s32.totalorder %s132, 0
      %s135 = sadd.s32 %s134, 1
      %s136 = scalar_select %p133, %s134, %s135
      %p139 = pneg %p133
      %p140 = scmp.eq.s32.totalorder %s14, 3
      %p141 = por %p139, %p140
      %p142 = scmp.ne.s32.totalorder %s134, %s137
      %p143 = scmp.eq.s32.totalorder %s14, 0
      %p144 = por %p142, %p143
      %p145 = scmp.ne.s32.totalorder %s134, %s137
      %p146 = scmp.eq.s32.totalorder %s19, 3
      %p147 = por %p145, %p146
      %p148 = scmp.ne.s32.totalorder %s137, %s138
      %p149 = scmp.eq.s32.totalorder %s19, 0
      %p150 = por %p148, %p149
      %p151 = scmp.ne.s32.totalorder %s137, %s138
      %p152 = scmp.eq.s32.totalorder %s20, 3
      %p153 = por %p151, %p152
      %p155 = scmp.ne.s32.totalorder %s138, %s154
      %p156 = scmp.eq.s32.totalorder %s20, 0
      %p157 = por %p155, %p156
      %p158 = scmp.le.s32.totalorder 1, %s14
      %p159 = scmp.lt.s32.totalorder %s14, 5
      %p160 = pnand %p158, %p159
      %p161 = pneg %p160
      // Predicated region
      $region9: #{tpu_custom_call.1} parent=5 // pred_check
        _
      $region10: #{tpu_custom_call.1} parent=5 // pred_check_branch
        %163 = sbr.rel (%p160) target = $region12
      $region11: #{tpu_custom_call.1} parent=5 // pred_region
        %s164 = ssub.s32 %s14, 1
        // Predicated region
        $region13: #{tpu_custom_call.1} parent=11 // pred_check
          %p165 = pneg %p61
        $region14: #{tpu_custom_call.1} parent=11 // pred_check_branch
          %167 = sbr.rel (%p165) target = $region16
        $region15: #{tpu_custom_call.1} parent=11 // pred_region
          _
        $region16: #{tpu_custom_call.1} parent=11 // pred_fallthru
          _
        // Predicated region
        $region17: #{tpu_custom_call.1} parent=11 // pred_check
          %p168 = pneg %p82
        $region18: #{tpu_custom_call.1} parent=11 // pred_check_branch
          %170 = sbr.rel (%p168) target = $region20
        $region19: #{tpu_custom_call.1} parent=11 // pred_region
          _
        $region20: #{tpu_custom_call.1} parent=11 // pred_fallthru
          _
        // Predicated region
        $region21: #{tpu_custom_call.1} parent=11 // pred_check
          %p171 = pneg %p103
        $region22: #{tpu_custom_call.1} parent=11 // pred_check_branch
          %173 = sbr.rel (%p171) target = $region24
        $region23: #{tpu_custom_call.1} parent=11 // pred_region
          _
        $region24: #{tpu_custom_call.1} parent=11 // pred_fallthru
          _
        // Predicated region
        $region25: #{tpu_custom_call.1} parent=11 // pred_check
          %p174 = pneg %p124
        $region26: #{tpu_custom_call.1} parent=11 // pred_check_branch
          %176 = sbr.rel (%p174) target = $region28
        $region27: #{tpu_custom_call.1} parent=11 // pred_region
          _
        $region28: #{tpu_custom_call.1} parent=11 // pred_fallthru
          _
      $region12: #{tpu_custom_call.1} parent=5 // pred_fallthru
        _
      %p177 = scmp.lt.s32.totalorder %s14, 4
      // Predicated region
      $region29: #{tpu_custom_call.1} parent=5 // pred_check
        %p178 = pneg %p177
      $region30: #{tpu_custom_call.1} parent=5 // pred_check_branch
        %180 = sbr.rel (%p178) target = $region32
      $region31: #{tpu_custom_call.1} parent=5 // pred_region
        // Predicated region
        $region33: #{tpu_custom_call.1} parent=31 // pred_check
          %p181 = pneg %p34
        $region34: #{tpu_custom_call.1} parent=31 // pred_check_branch
          %183 = sbr.rel (%p181) target = $region36
        $region35: #{tpu_custom_call.1} parent=31 // pred_region
          %s184 = smul.u32 4, %s14
          %p185 = scmp.lt.s32.totalorder %s184, 15
          %s186 = scalar_select %p185, %s184, 15
          %s187 = smul.addr %s186, 4
          %s188 = scalar_lea.vmem %s0, %s187
          %s189 = smul.u32 4, %s14
        $region36: #{tpu_custom_call.1} parent=31 // pred_fallthru
          _
      $region32: #{tpu_custom_call.1} parent=5 // pred_fallthru
        _
      %p190 = scmp.le.s32.totalorder 1, %s14
      %p191 = scmp.lt.s32.totalorder %s14, 5
      %p192 = pnand %p190, %p191
      %p193 = pneg %p192
      // Predicated region
      $region37: #{tpu_custom_call.1} parent=5 // pred_check
        _
      $region38: #{tpu_custom_call.1} parent=5 // pred_check_branch
        %195 = sbr.rel (%p192) target = $region40
      $region39: #{tpu_custom_call.1} parent=5 // pred_region
        %s196 = ssub.s32 %s14, 1
        %s197 = smul.u32 4, %s19
        %p198 = scmp.lt.s32.totalorder %s197, 15
        %s199 = scalar_select %p198, %s197, 15
        %s200 = smul.addr %s199, 4
        %s201 = scalar_lea.vmem %s0, %s200
        %p202 = pneg %p40
        %p203 = pneg %p37
        %p204 = pneg %p61
        %p205 = pneg %p58
        %p206 = pneg %p82
        %p207 = pneg %p79
        %p208 = pneg %p103
        %p209 = pneg %p100
        %p210 = pneg %p124
        %p211 = pneg %p121
        %p212 = pneg %p150
        %p213 = pneg %p147
        %s214 = sand.u32 %s137, 1
        %s215 = scalar_lea.sflag [#allocation3], %s214
        %s216 = sand.u32 %s137, 1
        %s217 = smul.addr %s216, 16
        %s218 = scalar_lea.vmem [#allocation2], %s217
        %s219 = smul.u32 4, %s19
        %p220 = scmp.lt.s32.totalorder %s219, 15
        %s221 = scalar_select %p220, %s219, 15
        %s222 = smul.addr %s221, 4
        %s223 = scalar_lea.vmem %s0, %s222
        %s224 = smul.u32 4, %s19
        %s225 = smul.u32 4, %s19
        %v226 = vld [vmem:[%s1] sm:$0xff]
        %v227 = vld [vmem:[%s1 + $0x8] sm:$0xff]
        %v228 = vld [vmem:[%s1 + $0x10] sm:$0xff]
        %v229 = vld [vmem:[%s1 + $0x18] sm:$0xff]
        %v230 = vld [vmem:[%s1 + $0x20] sm:$0xff]
        %v231 = vld [vmem:[%s1 + $0x28] sm:$0xff]
        %v232 = vld [vmem:[%s1 + $0x30] sm:$0xff]
        %v233 = vld [vmem:[%s1 + $0x38] sm:$0xff]
        %v234 = vld [vmem:[%s1 + $0x40] sm:$0xff]
        %v235 = vld [vmem:[%s1 + $0x48] sm:$0xff]
        %v236 = vld [vmem:[%s1 + $0x50] sm:$0xff]
        %v237 = vld [vmem:[%s1 + $0x58] sm:$0xff]
        %v238 = vld [vmem:[%s1 + $0x60] sm:$0xf]
        %v239 = vld [vmem:[%s223] sm:$0x77]
        %v240 = vld [vmem:[%s223 + $0x8] sm:$0x77]
        %v241 = vld [vmem:[%s2] sm:$0xff]
        %v242 = vld [vmem:[%s2 + $0x8] sm:$0xff]
        %v243 = vld [vmem:[%s2 + $0x10] sm:$0xff]
        %v244 = vld [vmem:[%s2 + $0x18] sm:$0xff]
        %v245 = vld [vmem:[%s2 + $0x20] sm:$0xff]
        %v246 = vld [vmem:[%s2 + $0x28] sm:$0xff]
        %v247 = vld [vmem:[%s2 + $0x30] sm:$0xff]
        %v248 = vld [vmem:[%s2 + $0x38] sm:$0xff]
        %v249 = vld [vmem:[%s2 + $0x40] sm:$0xff]
        %v250 = vld [vmem:[%s2 + $0x48] sm:$0xff]
        %v251 = vld [vmem:[%s2 + $0x50] sm:$0xff]
        %v252 = vld [vmem:[%s2 + $0x58] sm:$0xff]
        %v253 = vld [vmem:[%s2 + $0x60] sm:$0xf]
        %255 = vset.pattern.permute.xlu0 0
        %256 = vperm.xlu0 %255, %v241
        %v257 = vpop.permute.xlu0 %256
        %260 = vset.pattern.permute.xlu0 0
        %261 = vperm.xlu0 %260, %v242
        %v262 = vpop.permute.xlu0 %261
        %265 = vset.pattern.permute.xlu0 0
        %266 = vperm.xlu0 %265, %v243
        %v267 = vpop.permute.xlu0 %266
        %270 = vset.pattern.permute.xlu0 0
        %271 = vperm.xlu0 %270, %v244
        %v272 = vpop.permute.xlu0 %271
        %275 = vset.pattern.permute.xlu0 0
        %276 = vperm.xlu0 %275, %v245
        %v277 = vpop.permute.xlu0 %276
        %280 = vset.pattern.permute.xlu0 0
        %281 = vperm.xlu0 %280, %v246
        %v282 = vpop.permute.xlu0 %281
        %285 = vset.pattern.permute.xlu0 0
        %286 = vperm.xlu0 %285, %v247
        %v287 = vpop.permute.xlu0 %286
        %290 = vset.pattern.permute.xlu0 0
        %291 = vperm.xlu0 %290, %v248
        %v292 = vpop.permute.xlu0 %291
        %295 = vset.pattern.permute.xlu0 0
        %296 = vperm.xlu0 %295, %v249
        %v297 = vpop.permute.xlu0 %296
        %300 = vset.pattern.permute.xlu0 0
        %301 = vperm.xlu0 %300, %v250
        %v302 = vpop.permute.xlu0 %301
        %305 = vset.pattern.permute.xlu0 0
        %306 = vperm.xlu0 %305, %v251
        %v307 = vpop.permute.xlu0 %306
        %310 = vset.pattern.permute.xlu0 0
        %311 = vperm.xlu0 %310, %v252
        %v312 = vpop.permute.xlu0 %311
        %315 = vset.pattern.permute.xlu0 0
        %316 = vperm.xlu0 %315, %v253
        %v317 = vpop.permute.xlu0 %316
        %v321 = vcombine.high %v239, %v239
        %v322 = vcombine.high %v240, %v240
        %vm323 = vcmask 23552
        %v325 = vsel %vm323, %v226, 0
        %v328 = vsel %vm323, %v227, 0
        %v331 = vsel %vm323, %v228, 0
        %v334 = vsel %vm323, %v229, 0
        %v337 = vsel %vm323, %v230, 0
        %v340 = vsel %vm323, %v231, 0
        %v343 = vsel %vm323, %v232, 0
        %v346 = vsel %vm323, %v233, 0
        %v349 = vsel %vm323, %v234, 0
        %v352 = vsel %vm323, %v235, 0
        %v355 = vsel %vm323, %v236, 0
        %v358 = vsel %vm323, %v237, 0
        %v361 = vsel %vm323, %v238, 0
        %vm363 = vcmask 1042432
        %v364 = vsel %vm363, %v239, 0
        %v366 = vsel %vm363, %v321, 0
        %v368 = vsel %vm363, %v240, 0
        %v370 = vsel %vm363, %v322, 0
        %372 = vmatprep.subr.mxu0 %v366
        %373 = vmatpush1.msra.mxu0 %v364
        %374 = vmatprep.subr.mxu0 0.0
        %375 = vmatpush1.msra.mxu0 0.0
        %376 = vmatprep.subr.mxu0 0.0
        %377 = vmatpush1.msra.mxu0 0.0
        %378 = vmatprep.subr.mxu0 0.0
        %379 = vmatpush1.msra.mxu0 0.0
        %380 = vmatprep.subr.mxu0 0.0
        %381 = vmatpush1.msra.mxu0 0.0
        %382 = vmatprep.subr.mxu0 0.0
        %383 = vmatpush1.msra.mxu0 0.0
        %384 = vmatprep.subr.mxu0 0.0
        %385 = vmatpush1.msra.mxu0 0.0
        %386 = vmatprep.subr.mxu0 0.0
        %387 = vmatpush1.msra.mxu0 0.0
        %388 = vmatprep.subr.mxu0 0.0
        %389 = vmatpush1.msra.mxu0 0.0
        %390 = vmatprep.subr.mxu0 0.0
        %391 = vmatpush1.msra.mxu0 0.0
        %392 = vmatprep.subr.mxu0 0.0
        %393 = vmatpush1.msra.mxu0 0.0
        %394 = vmatprep.subr.mxu0 0.0
        %395 = vmatpush1.msra.mxu0 0.0
        %396 = vmatprep.subr.mxu0 0.0
        %397 = vmatpush1.msra.mxu0 0.0
        %398 = vmatprep.subr.mxu0 0.0
        %399 = vmatpush1.msra.mxu0 0.0
        %400 = vmatprep.subr.mxu0 0.0
        %401 = vmatpush1.msra.mxu0 0.0
        %402 = vmatprep.subr.mxu0 0.0
        %403 = vmatpush1.msra.mxu0 0.0
        %404 = vmatprep.subr.mxu0 0.0
        %405 = vmatpush1.msra.mxu0 0.0
        %406 = vmatprep.subr.mxu0 0.0
        %407 = vmatpush1.msra.mxu0 0.0
        %408 = vmatprep.subr.mxu0 0.0
        %409 = vmatpush1.msra.mxu0 0.0
        %410 = vmatprep.subr.mxu0 0.0
        %411 = vmatpush1.msra.mxu0 0.0
        %412 = vmatprep.subr.mxu0 0.0
        %413 = vmatpush1.msra.mxu0 0.0
        %414 = vmatprep.subr.mxu0 0.0
        %415 = vmatpush1.msra.mxu0 0.0
        %416 = vmatprep.subr.mxu0 0.0
        %417 = vmatpush1.msra.mxu0 0.0
        %418 = vmatprep.subr.mxu0 0.0
        %419 = vmatpush1.msra.mxu0 0.0
        %420 = vmatprep.subr.mxu0 0.0
        %421 = vmatpush1.msra.mxu0 0.0
        %422 = vmatprep.subr.mxu0 0.0
        %423 = vmatpush1.msra.mxu0 0.0
        %424 = vmatprep.subr.mxu0 0.0
        %425 = vmatpush1.msra.mxu0 0.0
        %426 = vmatprep.subr.mxu0 0.0
        %427 = vmatpush1.msra.mxu0 0.0
        %428 = vmatprep.subr.mxu0 0.0
        %429 = vmatpush1.msra.mxu0 0.0
        %430 = vmatprep.subr.mxu0 0.0
        %431 = vmatpush1.msra.mxu0 0.0
        %432 = vmatprep.subr.mxu0 0.0
        %433 = vmatpush1.msra.mxu0 0.0
        %434 = vmatprep.subr.mxu0 0.0
        %435 = vmatpush1.msra.mxu0 0.0
        %436 = vmatprep.mubr.f32.mxu0 0.0
        %437 = vmatmul.mubr.f32.gmra.mrb[0].mxu0 %v325
        %v438 = vpop.f32.mrb[0].mxu0
        %v439 = vadd.f32 %v257, %v438
        %v440 = vpop.f32.mrb[0].mxu0
        %v441 = vadd.f32 %v257, %v440
        %442 = vmatprep.mubr.f32.mxu0 0.0
        %443 = vmatmul.mubr.f32.gmra.mrb[0].mxu0 %v328
        %v444 = vpop.f32.mrb[0].mxu0
        %v445 = vadd.f32 %v262, %v444
        %v446 = vpop.f32.mrb[0].mxu0
        %v447 = vadd.f32 %v262, %v446
        %448 = vmatprep.mubr.f32.mxu0 0.0
        %449 = vmatmul.mubr.f32.gmra.mrb[0].mxu0 %v331
        %v450 = vpop.f32.mrb[0].mxu0
        %v451 = vadd.f32 %v267, %v450
        %v452 = vpop.f32.mrb[0].mxu0
        %v453 = vadd.f32 %v267, %v452
        %454 = vmatprep.mubr.f32.mxu0 0.0
        %455 = vmatmul.mubr.f32.gmra.mrb[0].mxu0 %v334
        %v456 = vpop.f32.mrb[0].mxu0
        %v457 = vadd.f32 %v272, %v456
        %v458 = vpop.f32.mrb[0].mxu0
        %v459 = vadd.f32 %v272, %v458
        %460 = vmatprep.mubr.f32.mxu0 0.0
        %461 = vmatmul.mubr.f32.gmra.mrb[0].mxu0 %v337
        %v462 = vpop.f32.mrb[0].mxu0
        %v463 = vadd.f32 %v277, %v462
        %v464 = vpop.f32.mrb[0].mxu0
        %v465 = vadd.f32 %v277, %v464
        %466 = vmatprep.mubr.f32.mxu0 0.0
        %467 = vmatmul.mubr.f32.gmra.mrb[0].mxu0 %v340
        %v468 = vpop.f32.mrb[0].mxu0
        %v469 = vadd.f32 %v282, %v468
        %v470 = vpop.f32.mrb[0].mxu0
        %v471 = vadd.f32 %v282, %v470
        %472 = vmatprep.mubr.f32.mxu0 0.0
        %473 = vmatmul.mubr.f32.gmra.mrb[0].mxu0 %v343
        %v474 = vpop.f32.mrb[0].mxu0
        %v475 = vadd.f32 %v287, %v474
        %v476 = vpop.f32.mrb[0].mxu0
        %v477 = vadd.f32 %v287, %v476
        %478 = vmatprep.mubr.f32.mxu0 0.0
        %479 = vmatmul.mubr.f32.gmra.mrb[0].mxu0 %v346
        %v480 = vpop.f32.mrb[0].mxu0
        %v481 = vadd.f32 %v292, %v480
        %v482 = vpop.f32.mrb[0].mxu0
        %v483 = vadd.f32 %v292, %v482
        %484 = vmatprep.mubr.f32.mxu0 0.0
        %485 = vmatmul.mubr.f32.gmra.mrb[0].mxu0 %v349
        %v486 = vpop.f32.mrb[0].mxu0
        %v487 = vadd.f32 %v297, %v486
        %v488 = vpop.f32.mrb[0].mxu0
        %v489 = vadd.f32 %v297, %v488
        %490 = vmatprep.mubr.f32.mxu0 0.0
        %491 = vmatmul.mubr.f32.gmra.mrb[0].mxu0 %v352
        %v492 = vpop.f32.mrb[0].mxu0
        %v493 = vadd.f32 %v302, %v492
        %v494 = vpop.f32.mrb[0].mxu0
        %v495 = vadd.f32 %v302, %v494
        %496 = vmatprep.mubr.f32.mxu0 0.0
        %497 = vmatmul.mubr.f32.gmra.mrb[0].mxu0 %v355
        %v498 = vpop.f32.mrb[0].mxu0
        %v499 = vadd.f32 %v307, %v498
        %v500 = vpop.f32.mrb[0].mxu0
        %v501 = vadd.f32 %v307, %v500
        %502 = vmatprep.mubr.f32.mxu0 0.0
        %503 = vmatmul.mubr.f32.gmra.mrb[0].mxu0 %v358
        %v504 = vpop.f32.mrb[0].mxu0
        %v505 = vadd.f32 %v312, %v504
        %v506 = vpop.f32.mrb[0].mxu0
        %v507 = vadd.f32 %v312, %v506
        %508 = vmatprep.mubr.f32.mxu0 0.0
        %509 = vmatmul.mubr.f32.gmra.mrb[0].mxu0 %v361
        %v510 = vpop.f32.mrb[0].mxu0
        %v511 = vadd.f32 %v317, %v510
        %v512 = vpop.f32.mrb[0].mxu0
        %v513 = vadd.f32 %v317, %v512
        %514 = vdwg.mxu0
        %515 = vmatprep.subr.mxu0 %v370
        %516 = vmatpush1.msra.mxu0 %v368
        %517 = vmatprep.subr.mxu0 0.0
        %518 = vmatpush1.msra.mxu0 0.0
        %519 = vmatprep.subr.mxu0 0.0
        %520 = vmatpush1.msra.mxu0 0.0
        %521 = vmatprep.subr.mxu0 0.0
        %522 = vmatpush1.msra.mxu0 0.0
        %523 = vmatprep.subr.mxu0 0.0
        %524 = vmatpush1.msra.mxu0 0.0
        %525 = vmatprep.subr.mxu0 0.0
        %526 = vmatpush1.msra.mxu0 0.0
        %527 = vmatprep.subr.mxu0 0.0
        %528 = vmatpush1.msra.mxu0 0.0
        %529 = vmatprep.subr.mxu0 0.0
        %530 = vmatpush1.msra.mxu0 0.0
        %531 = vmatprep.subr.mxu0 0.0
        %532 = vmatpush1.msra.mxu0 0.0
        %533 = vmatprep.subr.mxu0 0.0
        %534 = vmatpush1.msra.mxu0 0.0
        %535 = vmatprep.subr.mxu0 0.0
        %536 = vmatpush1.msra.mxu0 0.0
        %537 = vmatprep.subr.mxu0 0.0
        %538 = vmatpush1.msra.mxu0 0.0
        %539 = vmatprep.subr.mxu0 0.0
        %540 = vmatpush1.msra.mxu0 0.0
        %541 = vmatprep.subr.mxu0 0.0
        %542 = vmatpush1.msra.mxu0 0.0
        %543 = vmatprep.subr.mxu0 0.0
        %544 = vmatpush1.msra.mxu0 0.0
        %545 = vmatprep.subr.mxu0 0.0
        %546 = vmatpush1.msra.mxu0 0.0
        %547 = vmatprep.subr.mxu0 0.0
        %548 = vmatpush1.msra.mxu0 0.0
        %549 = vmatprep.subr.mxu0 0.0
        %550 = vmatpush1.msra.mxu0 0.0
        %551 = vmatprep.subr.mxu0 0.0
        %552 = vmatpush1.msra.mxu0 0.0
        %553 = vmatprep.subr.mxu0 0.0
        %554 = vmatpush1.msra.mxu0 0.0
        %555 = vmatprep.subr.mxu0 0.0
        %556 = vmatpush1.msra.mxu0 0.0
        %557 = vmatprep.subr.mxu0 0.0
        %558 = vmatpush1.msra.mxu0 0.0
        %559 = vmatprep.subr.mxu0 0.0
        %560 = vmatpush1.msra.mxu0 0.0
        %561 = vmatprep.subr.mxu0 0.0
        %562 = vmatpush1.msra.mxu0 0.0
        %563 = vmatprep.subr.mxu0 0.0
        %564 = vmatpush1.msra.mxu0 0.0
        %565 = vmatprep.subr.mxu0 0.0
        %566 = vmatpush1.msra.mxu0 0.0
        %567 = vmatprep.subr.mxu0 0.0
        %568 = vmatpush1.msra.mxu0 0.0
        %569 = vmatprep.subr.mxu0 0.0
        %570 = vmatpush1.msra.mxu0 0.0
        %571 = vmatprep.subr.mxu0 0.0
        %572 = vmatpush1.msra.mxu0 0.0
        %573 = vmatprep.subr.mxu0 0.0
        %574 = vmatpush1.msra.mxu0 0.0
        %575 = vmatprep.subr.mxu0 0.0
        %576 = vmatpush1.msra.mxu0 0.0
        %577 = vmatprep.subr.mxu0 0.0
        %578 = vmatpush1.msra.mxu0 0.0
        %579 = vmatprep.mubr.f32.mxu0 0.0
        %580 = vmatmul.mubr.f32.gmra.mrb[0].mxu0 %v325
        %v581 = vpop.f32.mrb[0].mxu0
        %v582 = vadd.f32 %v257, %v581
        %v583 = vpop.f32.mrb[0].mxu0
        %v584 = vadd.f32 %v257, %v583
        %585 = vmatprep.mubr.f32.mxu0 0.0
        %586 = vmatmul.mubr.f32.gmra.mrb[0].mxu0 %v328
        %v587 = vpop.f32.mrb[0].mxu0
        %v588 = vadd.f32 %v262, %v587
        %v589 = vpop.f32.mrb[0].mxu0
        %v590 = vadd.f32 %v262, %v589
        %591 = vmatprep.mubr.f32.mxu0 0.0
        %592 = vmatmul.mubr.f32.gmra.mrb[0].mxu0 %v331
        %v593 = vpop.f32.mrb[0].mxu0
        %v594 = vadd.f32 %v267, %v593
        %v595 = vpop.f32.mrb[0].mxu0
        %v596 = vadd.f32 %v267, %v595
        %597 = vmatprep.mubr.f32.mxu0 0.0
        %598 = vmatmul.mubr.f32.gmra.mrb[0].mxu0 %v334
        %v599 = vpop.f32.mrb[0].mxu0
        %v600 = vadd.f32 %v272, %v599
        %v601 = vpop.f32.mrb[0].mxu0
        %v602 = vadd.f32 %v272, %v601
        %603 = vmatprep.mubr.f32.mxu0 0.0
        %604 = vmatmul.mubr.f32.gmra.mrb[0].mxu0 %v337
        %v605 = vpop.f32.mrb[0].mxu0
        %v606 = vadd.f32 %v277, %v605
        %v607 = vpop.f32.mrb[0].mxu0
        %v608 = vadd.f32 %v277, %v607
        %609 = vmatprep.mubr.f32.mxu0 0.0
        %610 = vmatmul.mubr.f32.gmra.mrb[0].mxu0 %v340
        %v611 = vpop.f32.mrb[0].mxu0
        %v612 = vadd.f32 %v282, %v611
        %v613 = vpop.f32.mrb[0].mxu0
        %v614 = vadd.f32 %v282, %v613
        %615 = vmatprep.mubr.f32.mxu0 0.0
        %616 = vmatmul.mubr.f32.gmra.mrb[0].mxu0 %v343
        %v617 = vpop.f32.mrb[0].mxu0
        %v618 = vadd.f32 %v287, %v617
        %v619 = vpop.f32.mrb[0].mxu0
        %v620 = vadd.f32 %v287, %v619
        %621 = vmatprep.mubr.f32.mxu0 0.0
        %622 = vmatmul.mubr.f32.gmra.mrb[0].mxu0 %v346
        %v623 = vpop.f32.mrb[0].mxu0
        %v624 = vadd.f32 %v292, %v623
        %v625 = vpop.f32.mrb[0].mxu0
        %v626 = vadd.f32 %v292, %v625
        %627 = vmatprep.mubr.f32.mxu0 0.0
        %628 = vmatmul.mubr.f32.gmra.mrb[0].mxu0 %v349
        %v629 = vpop.f32.mrb[0].mxu0
        %v630 = vadd.f32 %v297, %v629
        %v631 = vpop.f32.mrb[0].mxu0
        %v632 = vadd.f32 %v297, %v631
        %633 = vmatprep.mubr.f32.mxu0 0.0
        %634 = vmatmul.mubr.f32.gmra.mrb[0].mxu0 %v352
        %v635 = vpop.f32.mrb[0].mxu0
        %v636 = vadd.f32 %v302, %v635
        %v637 = vpop.f32.mrb[0].mxu0
        %v638 = vadd.f32 %v302, %v637
        %639 = vmatprep.mubr.f32.mxu0 0.0
        %640 = vmatmul.mubr.f32.gmra.mrb[0].mxu0 %v355
        %v641 = vpop.f32.mrb[0].mxu0
        %v642 = vadd.f32 %v307, %v641
        %v643 = vpop.f32.mrb[0].mxu0
        %v644 = vadd.f32 %v307, %v643
        %645 = vmatprep.mubr.f32.mxu0 0.0
        %646 = vmatmul.mubr.f32.gmra.mrb[0].mxu0 %v358
        %v647 = vpop.f32.mrb[0].mxu0
        %v648 = vadd.f32 %v312, %v647
        %v649 = vpop.f32.mrb[0].mxu0
        %v650 = vadd.f32 %v312, %v649
        %651 = vmatprep.mubr.f32.mxu0 0.0
        %652 = vmatmul.mubr.f32.gmra.mrb[0].mxu0 %v361
        %v653 = vpop.f32.mrb[0].mxu0
        %v654 = vadd.f32 %v317, %v653
        %v655 = vpop.f32.mrb[0].mxu0
        %v656 = vadd.f32 %v317, %v655
        %657 = vdwg.mxu0
        %v658 = vmax.f32 %v439, 0.0
        %v659 = vmax.f32 %v441, 0.0
        %v660 = vmax.f32 %v582, 0.0
        %v661 = vmax.f32 %v584, 0.0
        %v662 = vmax.f32 %v445, 0.0
        %v663 = vmax.f32 %v447, 0.0
        %v664 = vmax.f32 %v588, 0.0
        %v665 = vmax.f32 %v590, 0.0
        %v666 = vmax.f32 %v451, 0.0
        %v667 = vmax.f32 %v453, 0.0
        %v668 = vmax.f32 %v594, 0.0
        %v669 = vmax.f32 %v596, 0.0
        %v670 = vmax.f32 %v457, 0.0
        %v671 = vmax.f32 %v459, 0.0
        %v672 = vmax.f32 %v600, 0.0
        %v673 = vmax.f32 %v602, 0.0
        %v674 = vmax.f32 %v463, 0.0
        %v675 = vmax.f32 %v465, 0.0
        %v676 = vmax.f32 %v606, 0.0
        %v677 = vmax.f32 %v608, 0.0
        %v678 = vmax.f32 %v469, 0.0
        %v679 = vmax.f32 %v471, 0.0
        %v680 = vmax.f32 %v612, 0.0
        %v681 = vmax.f32 %v614, 0.0
        %v682 = vmax.f32 %v475, 0.0
        %v683 = vmax.f32 %v477, 0.0
        %v684 = vmax.f32 %v618, 0.0
        %v685 = vmax.f32 %v620, 0.0
        %v686 = vmax.f32 %v481, 0.0
        %v687 = vmax.f32 %v483, 0.0
        %v688 = vmax.f32 %v624, 0.0
        %v689 = vmax.f32 %v626, 0.0
        %v690 = vmax.f32 %v487, 0.0
        %v691 = vmax.f32 %v489, 0.0
        %v692 = vmax.f32 %v630, 0.0
        %v693 = vmax.f32 %v632, 0.0
        %v694 = vmax.f32 %v493, 0.0
        %v695 = vmax.f32 %v495, 0.0
        %v696 = vmax.f32 %v636, 0.0
        %v697 = vmax.f32 %v638, 0.0
        %v698 = vmax.f32 %v499, 0.0
        %v699 = vmax.f32 %v501, 0.0
        %v700 = vmax.f32 %v642, 0.0
        %v701 = vmax.f32 %v644, 0.0
        %v702 = vmax.f32 %v505, 0.0
        %v703 = vmax.f32 %v507, 0.0
        %v704 = vmax.f32 %v648, 0.0
        %v705 = vmax.f32 %v650, 0.0
        %v706 = vmax.f32 %v511, 0.0
        %v707 = vmax.f32 %v513, 0.0
        %v708 = vmax.f32 %v654, 0.0
        %v709 = vmax.f32 %v656, 0.0
        %v710 = vld [vmem:[%s3] sm:$0x7]
        %v711 = vld [vmem:[%s4] sm:$0x7]
        %713 = vset.pattern.permute.xlu0 0
        %714 = vperm.xlu0 %713, %v711
        %v715 = vpop.permute.xlu0 %714
        %vm717 = vcmask 818176
        %v719 = vsel %vm717, %v710, 0
        %vm721 = vcmask 1043456
        %v723 = vsel %vm721, %v706, 0
        %v726 = vsel %vm721, %v707, 0
        %v729 = vsel %vm721, %v708, 0
        %v732 = vsel %vm721, %v709, 0
        %734 = vmatprep.subr.mxu0 %v659
        %735 = vmatpush1.msra.mxu0 %v658
        %736 = vmatprep.subr.mxu0 %v663
        %737 = vmatpush1.msra.mxu0 %v662
        %738 = vmatprep.subr.mxu0 %v667
        %739 = vmatpush1.msra.mxu0 %v666
        %740 = vmatprep.subr.mxu0 %v671
        %741 = vmatpush1.msra.mxu0 %v670
        %742 = vmatprep.subr.mxu0 %v675
        %743 = vmatpush1.msra.mxu0 %v674
        %744 = vmatprep.subr.mxu0 %v679
        %745 = vmatpush1.msra.mxu0 %v678
        %746 = vmatprep.subr.mxu0 %v683
        %747 = vmatpush1.msra.mxu0 %v682
        %748 = vmatprep.subr.mxu0 %v687
        %749 = vmatpush1.msra.mxu0 %v686
        %750 = vmatprep.subr.mxu0 %v691
        %751 = vmatpush1.msra.mxu0 %v690
        %752 = vmatprep.subr.mxu0 %v695
        %753 = vmatpush1.msra.mxu0 %v694
        %754 = vmatprep.subr.mxu0 %v699
        %755 = vmatpush1.msra.mxu0 %v698
        %756 = vmatprep.subr.mxu0 %v703
        %757 = vmatpush1.msra.mxu0 %v702
        %758 = vmatprep.subr.mxu0 %v726
        %759 = vmatpush1.msra.mxu0 %v723
        %760 = vmatprep.subr.mxu0 0.0
        %761 = vmatpush1.msra.mxu0 0.0
        %762 = vmatprep.subr.mxu0 0.0
        %763 = vmatpush1.msra.mxu0 0.0
        %764 = vmatprep.subr.mxu0 0.0
        %765 = vmatpush1.msra.mxu0 0.0
        %766 = vmatprep.subr.mxu0 0.0
        %767 = vmatpush1.msra.mxu0 0.0
        %768 = vmatprep.subr.mxu0 0.0
        %769 = vmatpush1.msra.mxu0 0.0
        %770 = vmatprep.subr.mxu0 0.0
        %771 = vmatpush1.msra.mxu0 0.0
        %772 = vmatprep.subr.mxu0 0.0
        %773 = vmatpush1.msra.mxu0 0.0
        %774 = vmatprep.subr.mxu0 0.0
        %775 = vmatpush1.msra.mxu0 0.0
        %776 = vmatprep.subr.mxu0 0.0
        %777 = vmatpush1.msra.mxu0 0.0
        %778 = vmatprep.subr.mxu0 0.0
        %779 = vmatpush1.msra.mxu0 0.0
        %780 = vmatprep.subr.mxu0 0.0
        %781 = vmatpush1.msra.mxu0 0.0
        %782 = vmatprep.subr.mxu0 0.0
        %783 = vmatpush1.msra.mxu0 0.0
        %784 = vmatprep.subr.mxu0 0.0
        %785 = vmatpush1.msra.mxu0 0.0
        %786 = vmatprep.subr.mxu0 0.0
        %787 = vmatpush1.msra.mxu0 0.0
        %788 = vmatprep.subr.mxu0 0.0
        %789 = vmatpush1.msra.mxu0 0.0
        %790 = vmatprep.subr.mxu0 0.0
        %791 = vmatpush1.msra.mxu0 0.0
        %792 = vmatprep.subr.mxu0 0.0
        %793 = vmatpush1.msra.mxu0 0.0
        %794 = vmatprep.subr.mxu0 0.0
        %795 = vmatpush1.msra.mxu0 0.0
        %796 = vmatprep.subr.mxu0 0.0
        %797 = vmatpush1.msra.mxu0 0.0
        %798 = vmatprep.mubr.f32.mxu0 0.0
        %799 = vmatmul.mubr.f32.gmra.mrb[0].mxu0 %v719
        %v800 = vpop.f32.mrb[0].mxu0
        %v801 = vadd.f32 %v715, %v800
        %v802 = vpop.f32.mrb[0].mxu0
        %v803 = vadd.f32 %v715, %v802
        %804 = vdwg.mxu0
        %805 = vmatprep.subr.mxu0 %v661
        %806 = vmatpush1.msra.mxu0 %v660
        %807 = vmatprep.subr.mxu0 %v665
        %808 = vmatpush1.msra.mxu0 %v664
        %809 = vmatprep.subr.mxu0 %v669
        %810 = vmatpush1.msra.mxu0 %v668
        %811 = vmatprep.subr.mxu0 %v673
        %812 = vmatpush1.msra.mxu0 %v672
        %813 = vmatprep.subr.mxu0 %v677
        %814 = vmatpush1.msra.mxu0 %v676
        %815 = vmatprep.subr.mxu0 %v681
        %816 = vmatpush1.msra.mxu0 %v680
        %817 = vmatprep.subr.mxu0 %v685
        %818 = vmatpush1.msra.mxu0 %v684
        %819 = vmatprep.subr.mxu0 %v689
        %820 = vmatpush1.msra.mxu0 %v688
        %821 = vmatprep.subr.mxu0 %v693
        %822 = vmatpush1.msra.mxu0 %v692
        %823 = vmatprep.subr.mxu0 %v697
        %824 = vmatpush1.msra.mxu0 %v696
        %825 = vmatprep.subr.mxu0 %v701
        %826 = vmatpush1.msra.mxu0 %v700
        %827 = vmatprep.subr.mxu0 %v705
        %828 = vmatpush1.msra.mxu0 %v704
        %829 = vmatprep.subr.mxu0 %v732
        %830 = vmatpush1.msra.mxu0 %v729
        %831 = vmatprep.subr.mxu0 0.0
        %832 = vmatpush1.msra.mxu0 0.0
        %833 = vmatprep.subr.mxu0 0.0
        %834 = vmatpush1.msra.mxu0 0.0
        %835 = vmatprep.subr.mxu0 0.0
        %836 = vmatpush1.msra.mxu0 0.0
        %837 = vmatprep.subr.mxu0 0.0
        %838 = vmatpush1.msra.mxu0 0.0
        %839 = vmatprep.subr.mxu0 0.0
        %840 = vmatpush1.msra.mxu0 0.0
        %841 = vmatprep.subr.mxu0 0.0
        %842 = vmatpush1.msra.mxu0 0.0
        %843 = vmatprep.subr.mxu0 0.0
        %844 = vmatpush1.msra.mxu0 0.0
        %845 = vmatprep.subr.mxu0 0.0
        %846 = vmatpush1.msra.mxu0 0.0
        %847 = vmatprep.subr.mxu0 0.0
        %848 = vmatpush1.msra.mxu0 0.0
        %849 = vmatprep.subr.mxu0 0.0
        %850 = vmatpush1.msra.mxu0 0.0
        %851 = vmatprep.subr.mxu0 0.0
        %852 = vmatpush1.msra.mxu0 0.0
        %853 = vmatprep.subr.mxu0 0.0
        %854 = vmatpush1.msra.mxu0 0.0
        %855 = vmatprep.subr.mxu0 0.0
        %856 = vmatpush1.msra.mxu0 0.0
        %857 = vmatprep.subr.mxu0 0.0
        %858 = vmatpush1.msra.mxu0 0.0
        %859 = vmatprep.subr.mxu0 0.0
        %860 = vmatpush1.msra.mxu0 0.0
        %861 = vmatprep.subr.mxu0 0.0
        %862 = vmatpush1.msra.mxu0 0.0
        %863 = vmatprep.subr.mxu0 0.0
        %864 = vmatpush1.msra.mxu0 0.0
        %865 = vmatprep.subr.mxu0 0.0
        %866 = vmatpush1.msra.mxu0 0.0
        %867 = vmatprep.subr.mxu0 0.0
        %868 = vmatpush1.msra.mxu0 0.0
        %869 = vmatprep.mubr.f32.mxu0 0.0
        %870 = vmatmul.mubr.f32.gmra.mrb[0].mxu0 %v719
        %v871 = vpop.f32.mrb[0].mxu0
        %v872 = vadd.f32 %v715, %v871
        %v873 = vpop.f32.mrb[0].mxu0
        %v874 = vadd.f32 %v715, %v873
        %875 = vdwg.mxu0
        %v880 = vcombine.low %v801, %v803
        %v881 = vcombine.low %v872, %v874
        %884 = vst [vmem:[%s218] sm:$0x77] %v880
        %885 = vst [vmem:[%s218 + $0x8] sm:$0x77] %v881
        %s886 = sand.u32 %s137, 1
        %s887 = scalar_lea.sflag [#allocation3], %s886
        %s888 = sand.u32 %s137, 1
        %s889 = smul.addr %s888, 16
        %s890 = scalar_lea.vmem [#allocation2], %s889
        // Predicated region
        $region41: #{tpu_custom_call.1} parent=39 // pred_check
          %p891 = pneg %p147
        $region42: #{tpu_custom_call.1} parent=39 // pred_check_branch
          %893 = sbr.rel (%p891) target = $region44
        $region43: #{tpu_custom_call.1} parent=39 // pred_region
          %s894 = smul.u32 4, %s19
          %s896 = ssub.s32 256, 256
          %897 = vsyncadd %s887, %s896
          %s898 = smul.addr %s894, 64
          %s899 = scalar_lea.hbm %s5, %s898
          %s901 = sshll.u32 %s890, 4
          %s902 = int_to_ptr.vmem [resolvable:$true] %s901
          %904 = dma.vmem_to_hbm [thread:$0]  %s902, 256, %s899, %s887
        $region44: #{tpu_custom_call.1} parent=39 // pred_fallthru
          _
      $region40: #{tpu_custom_call.1} parent=5 // pred_fallthru
        _
      %p905 = scmp.le.s32.totalorder 2, %s14
      // Predicated region
      $region45: #{tpu_custom_call.1} parent=5 // pred_check
        %p906 = pneg %p905
      $region46: #{tpu_custom_call.1} parent=5 // pred_check_branch
        %908 = sbr.rel (%p906) target = $region48
      $region47: #{tpu_custom_call.1} parent=5 // pred_region
        %s909 = ssub.s32 %s14, 2
        // Predicated region
        $region49: #{tpu_custom_call.1} parent=47 // pred_check
          %p910 = pneg %p153
        $region50: #{tpu_custom_call.1} parent=47 // pred_check_branch
          %912 = sbr.rel (%p910) target = $region52
        $region51: #{tpu_custom_call.1} parent=47 // pred_region
          %s913 = sand.u32 %s138, 1
          %s914 = scalar_lea.sflag [#allocation3], %s913
          %s915 = sand.u32 %s138, 1
          %s916 = smul.addr %s915, 16
          %s917 = scalar_lea.vmem [#allocation2], %s916
          %918 = dma.done %s914, 256
        $region52: #{tpu_custom_call.1} parent=47 // pred_fallthru
          _
      $region48: #{tpu_custom_call.1} parent=5 // pred_fallthru
        _
    $region6: #{tpu_custom_call.1} parent=1 // loop_footer
      %s18 = sadd.s32 1, %s14
    $region7: #{tpu_custom_call.1} parent=1 // loop_footer_branch
      %13 = sbr.rel target = $region3
    $region8: #{tpu_custom_call.1} parent=1 // loop_exit
      _
    %919 = vsyncpa [#allocation3], 1
    %s920 = scalar_lea.sflag [#allocation3], 1
    %921 = vsyncpa %s920, 1

</llo_original>
